<compile_context>
chip_gen: v5e
topology: v5e:2x2
jax: 0.10.0
libtpu: 0.0.40
codegen_flags: <defaults>
</compile_context>

<pallas_src>
import numpy as np
import jax
import jax.numpy as jnp
from jax.experimental import pallas as pl
from jax.experimental.pallas import tpu as pltpu


# ----------------------------------------------------------------------------
# Linear-operator construction (glue, plain numpy)
# ----------------------------------------------------------------------------
def adaptive_pool_matrix(out_size: int, in_size: int) -> np.ndarray:
    """Row-stochastic matrix M (out_size, in_size): M @ v == AdaptiveAvgPool1d."""
    m = np.zeros((out_size, in_size), np.float32)
    for i in range(out_size):
        start = (i * in_size) // out_size
        end = -((-(i + 1) * in_size) // out_size)  # ceil((i+1)*in/out)
        m[i, start:end] = 1.0 / float(end - start)
    return m


def bilinear_matrix(out_size: int, in_size: int) -> np.ndarray:
    """Matrix U (out_size, in_size): U @ v == bilinear resize, align_corners=False
    (matches F.interpolate(..., mode='bilinear') default)."""
    m = np.zeros((out_size, in_size), np.float32)
    if in_size == 1:
        m[:, 0] = 1.0
        return m
    scale = in_size / out_size
    for o in range(out_size):
        src = (o + 0.5) * scale - 0.5
        src = max(src, 0.0)
        i0 = min(int(np.floor(src)), in_size - 1)
        i1 = min(i0 + 1, in_size - 1)
        frac = src - i0
        m[o, i0] += 1.0 - frac
        m[o, i1] += frac
    return m


# ----------------------------------------------------------------------------
# Fused Pallas kernel: all pyramid scales + identity, stacked matmuls
# ----------------------------------------------------------------------------
def _ppm_kernel(x_ref, w_ref, bias_ref, pT_ref, uT_ref, mask_ref, o_ref):
    """Block shapes:
      x_ref    : (nb, C, HW)       f32, channels on sublanes, spatial on lanes
      w_ref    : (S*R, C)          bf16, all 1x1-conv weights, BN scale folded
      bias_ref : (S*R, 1)          f32, BN bias per stacked row
      pT_ref   : (HW, sum_ss)      bf16, column-concatenated pool operators
      uT_ref   : (sum_ss, HW)      bf16, row-stacked upsample operators
      mask_ref : (S*R, sum_ss)     f32, 1 on matching (scale-row, scale-col) blocks
      o_ref    : (nb, C_out, HW)   f32, pre-concatenated output
    """
    nb = x_ref.shape[0]
    C = x_ref.shape[1]
    SR = w_ref.shape[0]

    # Constants loaded once (hoisted out of the per-image loop).
    w = w_ref[...]
    pT = pT_ref[...]
    uT = uT_ref[...]
    bias = bias_ref[...]
    mask = mask_ref[...]

    for i in range(nb):  # static, tiny (nb == images_per_step)
        x_f32 = x_ref[i]                              # (C, HW) f32
        # Identity passthrough (torch.cat puts x first) -- exact, no bf16 round.
        o_ref[i, 0:C, :] = x_f32

        xb = x_f32.astype(jnp.bfloat16)
        # 1x1 conv for ALL scales at once (conv commutes with the pool).
        y = jnp.dot(w, xb, preferred_element_type=jnp.float32)            # (SR, HW)
        # Adaptive average pool against all scales' operators.
        pooled = jnp.dot(y.astype(jnp.bfloat16), pT,
                         preferred_element_type=jnp.float32)              # (SR, sum_ss)
        # BN bias + ReLU, then zero the off-scale blocks so the stacked
        # upsample only picks up each row's own scale.
        z = jnp.maximum(pooled + bias, 0.0) * mask
        # Bilinear upsample back to (HW,) lanes for every stacked row.
        up = jnp.dot(z.astype(jnp.bfloat16), uT,
                     preferred_element_type=jnp.float32)                  # (SR, HW)
        # One aligned (multiple-of-8 sublane) store for all branches.
        o_ref[i, C:C + SR, :] = up.astype(o_ref.dtype)


def pyramid_pooling_forward(x_nchw, fused, *, images_per_step=None):
    """Forward pass. Input/output are NCHW f32 to match the PyTorch module.

    images_per_step=None collapses the whole batch into one grid step (best on
    1-TC v5e/v6e). On v7x set images_per_step=1 so both TensorCores get
    "parallel" grid points.
    """
    N, C, H, W = x_nchw.shape
    HW = H * W
    SR = fused["w_all"].shape[0]
    sum_ss = fused["pT_all"].shape[1]
    C_out = C + SR

    nb = N if images_per_step is None else images_per_step
    assert N % nb == 0

    # NCHW flattened over (H, W) is already channels-on-sublanes /
    # spatial-on-lanes; this reshape is free (contiguous), no transpose.
    x_flat = x_nchw.reshape(N, C, HW)

    flops = 2 * N * SR * HW * (C + 2 * sum_ss)
    bytes_accessed = (
        4 * N * HW * (C + C_out)
        + 2 * (fused["w_all"].size + fused["pT_all"].size + fused["uT_all"].size)
        + 4 * (fused["bias_all"].size + fused["mask"].size)
    )

    out_flat = pl.pallas_call(
        _ppm_kernel,
        out_shape=jax.ShapeDtypeStruct((N, C_out, HW), jnp.float32),
        grid=(N // nb,),
        in_specs=[
            pl.BlockSpec((nb, C, HW), lambda b: (b, 0, 0)),
            # Grid-invariant operators (block == full array, loaded once per call).
            pl.BlockSpec(fused["w_all"].shape, lambda b: (0, 0)),
            pl.BlockSpec(fused["bias_all"].shape, lambda b: (0, 0)),
            pl.BlockSpec(fused["pT_all"].shape, lambda b: (0, 0)),
            pl.BlockSpec(fused["uT_all"].shape, lambda b: (0, 0)),
            pl.BlockSpec(fused["mask"].shape, lambda b: (0, 0)),
        ],
        out_specs=pl.BlockSpec((nb, C_out, HW), lambda b: (b, 0, 0)),
        compiler_params=pltpu.CompilerParams(
            dimension_semantics=("parallel",)),
        cost_estimate=pl.CostEstimate(
            flops=int(flops), transcendentals=0,
            bytes_accessed=int(bytes_accessed)),
    )(x_flat, fused["w_all"], fused["bias_all"], fused["pT_all"],
      fused["uT_all"], fused["mask"])
    return out_flat.reshape(N, C_out, H, W)


# ----------------------------------------------------------------------------
# Parameters (glue)
# ----------------------------------------------------------------------------
def make_params(key, in_dim, reduction_dim, setting, H, W):
    """Deterministic synthetic per-scale parameters (eval-mode BN folded)."""
    params = []
    for s in setting:
        key, k_w, k_mean, k_var = jax.random.split(key, 4)
        # Conv2d(in_dim, reduction_dim, 1, bias=False): weight (R, C, 1, 1) -> (R, C)
        conv_w = jax.random.normal(k_w, (reduction_dim, in_dim), jnp.float32) * 0.1
        # BatchNorm2d(reduction_dim) inference stats -> fold into scale / bias
        gamma = 1.0 + 0.1 * jnp.arange(reduction_dim, dtype=jnp.float32)
        beta = 0.05 * jnp.arange(reduction_dim, dtype=jnp.float32)
        running_mean = jax.random.normal(k_mean, (reduction_dim,), jnp.float32) * 0.1
        running_var = 1.0 + 0.1 * jax.random.uniform(k_var, (reduction_dim,), jnp.float32)
        eps = 1e-5
        bn_scale = gamma / jnp.sqrt(running_var + eps)
        bn_bias = beta - running_mean * bn_scale

        ph = adaptive_pool_matrix(s, H)
        pw = adaptive_pool_matrix(s, W)
        uh = bilinear_matrix(H, s)
        uw = bilinear_matrix(W, s)
        pfull = np.kron(ph, pw)            # (ss, HW)
        ufull = np.kron(uh, uw)            # (HW, ss)
        params.append(dict(
            pT=jnp.asarray(pfull.T),                 # (HW, ss)
            uT=jnp.asarray(ufull.T),                 # (ss, HW)
            wT=conv_w * bn_scale[:, None],           # (R, C), BN scale folded (exact)
            bias=bn_bias.reshape(-1, 1),             # (R, 1)
        ))
    return params


def fuse_params(params):
    """Stack per-scale operators into the fused kernel operands."""
    R = params[0]["wT"].shape[0]
    ss_list = [int(p["pT"].shape[1]) for p in params]
    SR = R * len(params)
    sum_ss = sum(ss_list)

    w_all = jnp.concatenate([p["wT"] for p in params], axis=0)       # (S*R, C)
    bias_all = jnp.concatenate([p["bias"] for p in params], axis=0)  # (S*R, 1)
    pT_all = jnp.concatenate([p["pT"] for p in params], axis=1)      # (HW, sum_ss)
    uT_all = jnp.concatenate([p["uT"] for p in params], axis=0)      # (sum_ss, HW)

    mask = np.zeros((SR, sum_ss), np.float32)
    col = 0
    for i, ss in enumerate(ss_list):
        mask[i * R:(i + 1) * R, col:col + ss] = 1.0
        col += ss

    return dict(
        w_all=w_all.astype(jnp.bfloat16),
        bias_all=bias_all.astype(jnp.float32),
        pT_all=pT_all.astype(jnp.bfloat16),
        uT_all=uT_all.astype(jnp.bfloat16),
        mask=jnp.asarray(mask),
    )


def pyramid_pooling_reference(x_nchw, params):
    """Plain-JAX f32 per-scale reference using the same linear operators."""
    N, C, H, W = x_nchw.shape
    xf = x_nchw.reshape(N, C, H * W)
    outs = [xf]
    for p in params:
        pooled = jnp.einsum("nch,hs->ncs", xf, p["pT"])
        y = jnp.einsum("rc,ncs->nrs", p["wT"], pooled)
        z = jnp.maximum(y + p["bias"][None], 0.0)
        outs.append(jnp.einsum("nrs,sh->nrh", z, p["uT"]))
    return jnp.concatenate(outs, axis=1).reshape(N, -1, H, W)


# ----------------------------------------------------------------------------
# Main
# ----------------------------------------------------------------------------
if __name__ == "__main__":
    # Module config (small, consistent with the PyTorch __init__):
    #   PyramidPoolingModule(in_dim=8, reduction_dim=4, setting=(1, 2, 3, 6))
    N, C_IN, H, W = 2, 8, 16, 16
    REDUCTION_DIM = 4
    SETTING = (1, 2, 3, 6)

    key = jax.random.PRNGKey(0)
    key, k_x = jax.random.split(key)
    x = jax.random.normal(k_x, (N, C_IN, H, W), jnp.float32)   # NCHW, like PyTorch

    params = make_params(key, C_IN, REDUCTION_DIM, SETTING, H, W)
    fused = fuse_params(params)

    out = pyramid_pooling_forward(x, fused)
    out = jax.block_until_ready(out)

    expected_channels = C_IN + REDUCTION_DIM * len(SETTING)
    assert out.shape == (N, expected_channels, H, W), out.shape

    ref = jax.block_until_ready(pyramid_pooling_reference(x, params))
    # Identity channels are bit-exact; branch channels carry bf16-input /
    # f32-accumulate rounding, hence the loosened tolerance.
    np.testing.assert_allclose(np.asarray(out), np.asarray(ref),
                               rtol=2e-2, atol=2e-2)

    print("KERNEL_OK")
</pallas_src>

<mosaic_0001>
module attributes {stable_mosaic.version = 11 : i64} {
  func.func @_ppm_kernel(%arg0: i32, %arg1: memref<2x8x256xf32, #tpu.memory_space<vmem>>, %arg2: memref<16x8xbf16, #tpu.memory_space<vmem>>, %arg3: memref<16x1xf32, #tpu.memory_space<vmem>>, %arg4: memref<256x50xbf16, #tpu.memory_space<vmem>>, %arg5: memref<50x256xbf16, #tpu.memory_space<vmem>>, %arg6: memref<16x50xf32, #tpu.memory_space<vmem>>, %arg7: memref<2x24x256xf32, #tpu.memory_space<vmem>>) attributes {dimension_semantics = [#tpu.dimension_semantics<parallel>], iteration_bounds = array<i64: 1>, scalar_prefetch = 0 : i64, scratch_operands = 0 : i64, tpu.core_type = #tpu.core_type<tc>, window_params = [{transform_indices = @transform_0, window_bounds = array<i64: 2, 8, 256>}, {pipeline_mode = #tpu.pipeline_mode<synchronous>, transform_indices = @transform_1, window_bounds = array<i64: 16, 8>}, {pipeline_mode = #tpu.pipeline_mode<synchronous>, transform_indices = @transform_2, window_bounds = array<i64: 16, 1>}, {pipeline_mode = #tpu.pipeline_mode<synchronous>, transform_indices = @transform_3, window_bounds = array<i64: 256, 50>}, {pipeline_mode = #tpu.pipeline_mode<synchronous>, transform_indices = @transform_4, window_bounds = array<i64: 50, 256>}, {pipeline_mode = #tpu.pipeline_mode<synchronous>, transform_indices = @transform_5, window_bounds = array<i64: 16, 50>}, {transform_indices = @transform_6, window_bounds = array<i64: 2, 24, 256>}]} {
    %c0 = arith.constant 0 : index
    %c0_0 = arith.constant 0 : index
    %0 = vector.load %arg2[%c0, %c0_0] : memref<16x8xbf16, #tpu.memory_space<vmem>>, vector<16x8xbf16>
    %c0_1 = arith.constant 0 : index
    %c0_2 = arith.constant 0 : index
    %1 = vector.load %arg4[%c0_1, %c0_2] : memref<256x50xbf16, #tpu.memory_space<vmem>>, vector<256x50xbf16>
    %c0_3 = arith.constant 0 : index
    %c0_4 = arith.constant 0 : index
    %2 = vector.load %arg5[%c0_3, %c0_4] : memref<50x256xbf16, #tpu.memory_space<vmem>>, vector<50x256xbf16>
    %c0_5 = arith.constant 0 : index
    %c0_6 = arith.constant 0 : index
    %3 = vector.load %arg3[%c0_5, %c0_6] : memref<16x1xf32, #tpu.memory_space<vmem>>, vector<16x1xf32>
    %c0_7 = arith.constant 0 : index
    %c0_8 = arith.constant 0 : index
    %4 = vector.load %arg6[%c0_7, %c0_8] : memref<16x50xf32, #tpu.memory_space<vmem>>, vector<16x50xf32>
    %c0_9 = arith.constant 0 : index
    %c0_10 = arith.constant 0 : index
    %c0_11 = arith.constant 0 : index
    %5 = vector.load %arg1[%c0_9, %c0_10, %c0_11] : memref<2x8x256xf32, #tpu.memory_space<vmem>>, vector<1x8x256xf32>
    %6 = vector.shape_cast %5 : vector<1x8x256xf32> to vector<8x256xf32>
    %c0_12 = arith.constant 0 : index
    %c0_13 = arith.constant 0 : index
    %c0_14 = arith.constant 0 : index
    %7 = vector.load %arg7[%c0_12, %c0_13, %c0_14] : memref<2x24x256xf32, #tpu.memory_space<vmem>>, vector<1x8x256xf32>
    %8 = vector.shape_cast %7 : vector<1x8x256xf32> to vector<8x256xf32>
    %9 = vector.shape_cast %6 : vector<8x256xf32> to vector<1x8x256xf32>
    tpu.vector_store %arg7[%c0_12, %c0_13, %c0_14], %9 {strides = array<i32>} : memref<2x24x256xf32, #tpu.memory_space<vmem>>, vector<1x8x256xf32>,
    %10 = arith.truncf %6 : vector<8x256xf32> to vector<8x256xbf16>
    %cst = arith.constant dense<0.000000e+00> : vector<16x256xf32>
    %11 = tpu.matmul %0, %10, %cst {dimension_numbers = #tpu.dot_dimension_numbers<[1], [0], [0], [1], [0, 0, 1, 1], [], []>} : vector<16x8xbf16>, vector<8x256xbf16>, vector<16x256xf32> -> vector<16x256xf32>
    %12 = arith.truncf %11 : vector<16x256xf32> to vector<16x256xbf16>
    %cst_15 = arith.constant dense<0.000000e+00> : vector<16x50xf32>
    %13 = tpu.matmul %12, %1, %cst_15 {dimension_numbers = #tpu.dot_dimension_numbers<[1], [0], [0], [1], [0, 0, 1, 1], [], []>} : vector<16x256xbf16>, vector<256x50xbf16>, vector<16x50xf32> -> vector<16x50xf32>
    %14 = vector.broadcast %3 : vector<16x1xf32> to vector<16x50xf32>
    %15 = arith.addf %13, %14 : vector<16x50xf32>
    %cst_16 = arith.constant 0.000000e+00 : f32
    %16 = vector.broadcast %cst_16 : f32 to vector<16x50xf32>
    %17 = arith.maximumf %15, %16 : vector<16x50xf32>
    %18 = arith.mulf %17, %4 : vector<16x50xf32>
    %19 = arith.truncf %18 : vector<16x50xf32> to vector<16x50xbf16>
    %cst_17 = arith.constant dense<0.000000e+00> : vector<16x256xf32>
    %20 = tpu.matmul %19, %2, %cst_17 {dimension_numbers = #tpu.dot_dimension_numbers<[1], [0], [0], [1], [0, 0, 1, 1], [], []>} : vector<16x50xbf16>, vector<50x256xbf16>, vector<16x256xf32> -> vector<16x256xf32>
    %c0_18 = arith.constant 0 : index
    %c8 = arith.constant 8 : index
    %c0_19 = arith.constant 0 : index
    %21 = vector.load %arg7[%c0_18, %c8, %c0_19] : memref<2x24x256xf32, #tpu.memory_space<vmem>>, vector<1x16x256xf32>
    %22 = vector.shape_cast %21 : vector<1x16x256xf32> to vector<16x256xf32>
    %23 = vector.shape_cast %20 : vector<16x256xf32> to vector<1x16x256xf32>
    tpu.vector_store %arg7[%c0_18, %c8, %c0_19], %23 {strides = array<i32>} : memref<2x24x256xf32, #tpu.memory_space<vmem>>, vector<1x16x256xf32>,
    %c1 = arith.constant 1 : index
    %c0_20 = arith.constant 0 : index
    %c0_21 = arith.constant 0 : index
    %24 = vector.load %arg1[%c1, %c0_20, %c0_21] : memref<2x8x256xf32, #tpu.memory_space<vmem>>, vector<1x8x256xf32>
    %25 = vector.shape_cast %24 : vector<1x8x256xf32> to vector<8x256xf32>
    %c1_22 = arith.constant 1 : index
    %c0_23 = arith.constant 0 : index
    %c0_24 = arith.constant 0 : index
    %26 = vector.load %arg7[%c1_22, %c0_23, %c0_24] : memref<2x24x256xf32, #tpu.memory_space<vmem>>, vector<1x8x256xf32>
    %27 = vector.shape_cast %26 : vector<1x8x256xf32> to vector<8x256xf32>
    %28 = vector.shape_cast %25 : vector<8x256xf32> to vector<1x8x256xf32>
    tpu.vector_store %arg7[%c1_22, %c0_23, %c0_24], %28 {strides = array<i32>} : memref<2x24x256xf32, #tpu.memory_space<vmem>>, vector<1x8x256xf32>,
    %29 = arith.truncf %25 : vector<8x256xf32> to vector<8x256xbf16>
    %cst_25 = arith.constant dense<0.000000e+00> : vector<16x256xf32>
    %30 = tpu.matmul %0, %29, %cst_25 {dimension_numbers = #tpu.dot_dimension_numbers<[1], [0], [0], [1], [0, 0, 1, 1], [], []>} : vector<16x8xbf16>, vector<8x256xbf16>, vector<16x256xf32> -> vector<16x256xf32>
    %31 = arith.truncf %30 : vector<16x256xf32> to vector<16x256xbf16>
    %cst_26 = arith.constant dense<0.000000e+00> : vector<16x50xf32>
    %32 = tpu.matmul %31, %1, %cst_26 {dimension_numbers = #tpu.dot_dimension_numbers<[1], [0], [0], [1], [0, 0, 1, 1], [], []>} : vector<16x256xbf16>, vector<256x50xbf16>, vector<16x50xf32> -> vector<16x50xf32>
    %33 = vector.broadcast %3 : vector<16x1xf32> to vector<16x50xf32>
    %34 = arith.addf %32, %33 : vector<16x50xf32>
    %cst_27 = arith.constant 0.000000e+00 : f32
    %35 = vector.broadcast %cst_27 : f32 to vector<16x50xf32>
    %36 = arith.maximumf %34, %35 : vector<16x50xf32>
    %37 = arith.mulf %36, %4 : vector<16x50xf32>
    %38 = arith.truncf %37 : vector<16x50xf32> to vector<16x50xbf16>
    %cst_28 = arith.constant dense<0.000000e+00> : vector<16x256xf32>
    %39 = tpu.matmul %38, %2, %cst_28 {dimension_numbers = #tpu.dot_dimension_numbers<[1], [0], [0], [1], [0, 0, 1, 1], [], []>} : vector<16x50xbf16>, vector<50x256xbf16>, vector<16x256xf32> -> vector<16x256xf32>
    %c1_29 = arith.constant 1 : index
    %c8_30 = arith.constant 8 : index
    %c0_31 = arith.constant 0 : index
    %40 = vector.load %arg7[%c1_29, %c8_30, %c0_31] : memref<2x24x256xf32, #tpu.memory_space<vmem>>, vector<1x16x256xf32>
    %41 = vector.shape_cast %40 : vector<1x16x256xf32> to vector<16x256xf32>
    %42 = vector.shape_cast %39 : vector<16x256xf32> to vector<1x16x256xf32>
    tpu.vector_store %arg7[%c1_29, %c8_30, %c0_31], %42 {strides = array<i32>} : memref<2x24x256xf32, #tpu.memory_space<vmem>>, vector<1x16x256xf32>,
    return
  }
  func.func @transform_0(%arg0: i32) -> (i32, i32, i32) {
    %c0_i32 = arith.constant 0 : i32
    %c0_i32_0 = arith.constant 0 : i32
    %c0_i32_1 = arith.constant 0 : i32
    return %arg0, %c0_i32, %c0_i32_0 : i32, i32, i32
  }
  func.func @transform_1(%arg0: i32) -> (i32, i32) {
    %c0_i32 = arith.constant 0 : i32
    %c0_i32_0 = arith.constant 0 : i32
    %c0_i32_1 = arith.constant 0 : i32
    return %c0_i32, %c0_i32_0 : i32, i32
  }
  func.func @transform_2(%arg0: i32) -> (i32, i32) {
    %c0_i32 = arith.constant 0 : i32
    %c0_i32_0 = arith.constant 0 : i32
    %c0_i32_1 = arith.constant 0 : i32
    return %c0_i32, %c0_i32_0 : i32, i32
  }
  func.func @transform_3(%arg0: i32) -> (i32, i32) {
    %c0_i32 = arith.constant 0 : i32
    %c0_i32_0 = arith.constant 0 : i32
    %c0_i32_1 = arith.constant 0 : i32
    return %c0_i32, %c0_i32_0 : i32, i32
  }
  func.func @transform_4(%arg0: i32) -> (i32, i32) {
    %c0_i32 = arith.constant 0 : i32
    %c0_i32_0 = arith.constant 0 : i32
    %c0_i32_1 = arith.constant 0 : i32
    return %c0_i32, %c0_i32_0 : i32, i32
  }
  func.func @transform_5(%arg0: i32) -> (i32, i32) {
    %c0_i32 = arith.constant 0 : i32
    %c0_i32_0 = arith.constant 0 : i32
    %c0_i32_1 = arith.constant 0 : i32
    return %c0_i32, %c0_i32_0 : i32, i32
  }
  func.func @transform_6(%arg0: i32) -> (i32, i32, i32) {
    %c0_i32 = arith.constant 0 : i32
    %c0_i32_0 = arith.constant 0 : i32
    %c0_i32_1 = arith.constant 0 : i32
    return %arg0, %c0_i32, %c0_i32_0 : i32, i32, i32
  }
}

</mosaic_0001>

<llo_original>
// kernel: tpu_custom_call.1
$region0: #{tpu_custom_call.1}
  #allocation0 [shape = 'u32[]', space=smem, size = 0x4, offset = 0x4, fixed_abs, tag = 'smem constant byte address 0x4 - core index']
  #allocation1 [shape = 'u32[72,128]{1,0:T(1,128)}', space=vmem, size = 0x9000, scoped, tag = 'internal scratch']
  %s0 = inlined_call_operand.vmem [shape: f32[2,8,256], index: 0, kind: input, shape index: {}]
  %s1 = inlined_call_operand.vmem [shape: bf16[16,8], index: 1, kind: input, shape index: {}]
  %s2 = inlined_call_operand.vmem [shape: f32[16,1], index: 2, kind: input, shape index: {}]
  %s3 = inlined_call_operand.vmem [shape: bf16[256,50], index: 3, kind: input, shape index: {}]
  %s4 = inlined_call_operand.vmem [shape: bf16[50,256], index: 4, kind: input, shape index: {}]
  %s5 = inlined_call_operand.vmem [shape: f32[16,50], index: 5, kind: input, shape index: {}]
  %s6 = inlined_call_operand.hbm [shape: f32[2,24,256], index: 6, kind: output, shape index: {}]
  %s7 = sld [smem:[#allocation0]]
  $region34: #{tpu_custom_call.1} parent=0
    _
  %s9 = ssub.s32 1, %s7
  %s10 = scalar_select 0, %s9, %s7
  $region1: #{tpu_custom_call.1} parent=0
    #allocation2 [shape = 'u8[49152]{0}', space=vmem, size = 0xc000, scoped, tag = 'output window, operand 0, single buffered']
    #allocation3 [shape = 's32[1]{0}', space=sflag, size = 0x4, scoped, tag = 'scoped memory for tpu_custom_call.1']
    %11 = vsyncpa [#allocation3], 0
    // Predicated region
    $region2: #{tpu_custom_call.1} parent=1 // pred_check
      _
    $region3: #{tpu_custom_call.1} parent=1 // pred_check_branch
      %13 = sbr.rel (0) target = $region5
    $region4: #{tpu_custom_call.1} parent=1 // pred_region
      _
    $region5: #{tpu_custom_call.1} parent=1 // pred_fallthru
      _
    // Predicated region
    $region6: #{tpu_custom_call.1} parent=1 // pred_check
      _
    $region7: #{tpu_custom_call.1} parent=1 // pred_check_branch
      %15 = sbr.rel (0) target = $region9
    $region8: #{tpu_custom_call.1} parent=1 // pred_region
      _
    $region9: #{tpu_custom_call.1} parent=1 // pred_fallthru
      _
    // Predicated region
    $region10: #{tpu_custom_call.1} parent=1 // pred_check
      _
    $region11: #{tpu_custom_call.1} parent=1 // pred_check_branch
      %17 = sbr.rel (0) target = $region13
    $region12: #{tpu_custom_call.1} parent=1 // pred_region
      _
    $region13: #{tpu_custom_call.1} parent=1 // pred_fallthru
      _
    // Predicated region
    $region14: #{tpu_custom_call.1} parent=1 // pred_check
      _
    $region15: #{tpu_custom_call.1} parent=1 // pred_check_branch
      %19 = sbr.rel (0) target = $region17
    $region16: #{tpu_custom_call.1} parent=1 // pred_region
      _
    $region17: #{tpu_custom_call.1} parent=1 // pred_fallthru
      _
    // Predicated region
    $region18: #{tpu_custom_call.1} parent=1 // pred_check
      _
    $region19: #{tpu_custom_call.1} parent=1 // pred_check_branch
      %21 = sbr.rel (0) target = $region21
    $region20: #{tpu_custom_call.1} parent=1 // pred_region
      _
    $region21: #{tpu_custom_call.1} parent=1 // pred_fallthru
      _
    // Predicated region
    $region22: #{tpu_custom_call.1} parent=1 // pred_check
      _
    $region23: #{tpu_custom_call.1} parent=1 // pred_check_branch
      %23 = sbr.rel (0) target = $region25
    $region24: #{tpu_custom_call.1} parent=1 // pred_region
      _
    $region25: #{tpu_custom_call.1} parent=1 // pred_fallthru
      _
    %v25 = vld [vmem:[%s1] sm:$0xf]
    %v26 = vld [vmem:[%s1 + $0x4] sm:$0xf]
    %v27 = vld [vmem:[%s3] sm:$0xf]
    %v28 = vld [vmem:[%s3 + $0x4] sm:$0xf]
    %v29 = vld [vmem:[%s3 + $0x8] sm:$0xf]
    %v30 = vld [vmem:[%s3 + $0xc] sm:$0xf]
    %v31 = vld [vmem:[%s3 + $0x10] sm:$0xf]
    %v32 = vld [vmem:[%s3 + $0x14] sm:$0xf]
    %v33 = vld [vmem:[%s3 + $0x18] sm:$0xf]
    %v34 = vld [vmem:[%s3 + $0x1c] sm:$0xf]
    %v35 = vld [vmem:[%s3 + $0x20] sm:$0xf]
    %v36 = vld [vmem:[%s3 + $0x24] sm:$0xf]
    %v37 = vld [vmem:[%s3 + $0x28] sm:$0xf]
    %v38 = vld [vmem:[%s3 + $0x2c] sm:$0xf]
    %v39 = vld [vmem:[%s3 + $0x30] sm:$0xf]
    %v40 = vld [vmem:[%s3 + $0x34] sm:$0xf]
    %v41 = vld [vmem:[%s3 + $0x38] sm:$0xf]
    %v42 = vld [vmem:[%s3 + $0x3c] sm:$0xf]
    %v43 = vld [vmem:[%s3 + $0x40] sm:$0xf]
    %v44 = vld [vmem:[%s3 + $0x44] sm:$0xf]
    %v45 = vld [vmem:[%s3 + $0x48] sm:$0xf]
    %v46 = vld [vmem:[%s3 + $0x4c] sm:$0xf]
    %v47 = vld [vmem:[%s3 + $0x50] sm:$0xf]
    %v48 = vld [vmem:[%s3 + $0x54] sm:$0xf]
    %v49 = vld [vmem:[%s3 + $0x58] sm:$0xf]
    %v50 = vld [vmem:[%s3 + $0x5c] sm:$0xf]
    %v51 = vld [vmem:[%s3 + $0x60] sm:$0xf]
    %v52 = vld [vmem:[%s3 + $0x64] sm:$0xf]
    %v53 = vld [vmem:[%s3 + $0x68] sm:$0xf]
    %v54 = vld [vmem:[%s3 + $0x6c] sm:$0xf]
    %v55 = vld [vmem:[%s3 + $0x70] sm:$0xf]
    %v56 = vld [vmem:[%s3 + $0x74] sm:$0xf]
    %v57 = vld [vmem:[%s3 + $0x78] sm:$0xf]
    %v58 = vld [vmem:[%s3 + $0x7c] sm:$0xf]
    %v59 = vld [vmem:[%s4] sm:$0xff]
    %v60 = vld [vmem:[%s4 + $0x8] sm:$0xff]
    %v61 = vld [vmem:[%s4 + $0x10] sm:$0xff]
    %v62 = vld [vmem:[%s4 + $0x18] sm:$0xff]
    %v63 = vld [vmem:[%s4 + $0x20] sm:$0xff]
    %v64 = vld [vmem:[%s4 + $0x28] sm:$0xff]
    %v65 = vld [vmem:[%s4 + $0x30] sm:$0x11]
    %v66 = vld [vmem:[%s2] sm:$0xff]
    %v67 = vld [vmem:[%s2 + $0x8] sm:$0xff]
    %v68 = vld [vmem:[%s5] sm:$0xff]
    %v69 = vld [vmem:[%s5 + $0x8] sm:$0xff]
    %v70 = vld [vmem:[%s0] sm:$0xff]
    %v71 = vld [vmem:[%s0 + $0x8] sm:$0xff]
    %72 = vst [vmem:[#allocation2] sm:$0xff] %v70
    %73 = vst [vmem:[#allocation2 + $0x8] sm:$0xff] %v71
    %v74 = vpack.c.bf16 %v70, %v70
    %v75 = vpack.c.bf16 %v71, %v71
    %v78 = vunpack.c.l.b16 %v25
    %v79 = vunpack.c.l.b16 %v26
    %v80 = vpack.c.b16 %v79, %v78
    %vm81 = vcmask 64512
    %v83 = vsel %vm81, %v80, 0
    %vm85 = vcmask 1043456
    %v87 = vsel %vm85, %v74, 0
    %v90 = vsel %vm85, %v75, 0
    %92 = vmatpush.bf16.msra.mxu0 0
    %93 = vmatpush.bf16.msra.mxu0 0
    %94 = vmatpush.bf16.msra.mxu0 0
    %95 = vmatpush.bf16.msra.mxu0 0
    %96 = vmatpush.bf16.msra.mxu0 0
    %97 = vmatpush.bf16.msra.mxu0 0
    %98 = vmatpush.bf16.msra.mxu0 0
    %99 = vmatpush.bf16.msra.mxu0 %v87
    %100 = vmatmul.bf16.gmra.mxu0 %v83
    %v101 = vpop.f32.mrf.mxu0
    %v102 = vadd.f32 0.0, %v101
    %v103 = vpop.f32.mrf.mxu0
    %v104 = vadd.f32 0.0, %v103
    %105 = vdwg.mxu0
    %106 = vmatpush.bf16.msra.mxu0 0
    %107 = vmatpush.bf16.msra.mxu0 0
    %108 = vmatpush.bf16.msra.mxu0 0
    %109 = vmatpush.bf16.msra.mxu0 0
    %110 = vmatpush.bf16.msra.mxu0 0
    %111 = vmatpush.bf16.msra.mxu0 0
    %112 = vmatpush.bf16.msra.mxu0 0
    %113 = vmatpush.bf16.msra.mxu0 %v90
    %114 = vmatmul.bf16.gmra.mxu0 %v83
    %v115 = vpop.f32.mrf.mxu0
    %v116 = vadd.f32 0.0, %v115
    %v117 = vpop.f32.mrf.mxu0
    %v118 = vadd.f32 0.0, %v117
    %119 = vdwg.mxu0
    %v120 = vpack.c.bf16 %v104, %v102
    %v121 = vpack.c.bf16 %v118, %v116
    %123 = vset.pattern.permute.xlu0 0
    %124 = vperm.xlu0 %123, %v66
    %v125 = vpop.permute.xlu0 %124
    %128 = vset.pattern.permute.xlu0 0
    %129 = vperm.xlu0 %128, %v67
    %v130 = vpop.permute.xlu0 %129
    %v164 = vunpack.c.l.b16 %v27
    %v165 = vunpack.c.l.b16 %v28
    %v166 = vunpack.c.l.b16 %v29
    %v167 = vunpack.c.l.b16 %v30
    %v168 = vunpack.c.l.b16 %v31
    %v169 = vunpack.c.l.b16 %v32
    %v170 = vunpack.c.l.b16 %v33
    %v171 = vunpack.c.l.b16 %v34
    %v172 = vunpack.c.l.b16 %v35
    %v173 = vunpack.c.l.b16 %v36
    %v174 = vunpack.c.l.b16 %v37
    %v175 = vunpack.c.l.b16 %v38
    %v176 = vunpack.c.l.b16 %v39
    %v177 = vunpack.c.l.b16 %v40
    %v178 = vunpack.c.l.b16 %v41
    %v179 = vunpack.c.l.b16 %v42
    %v180 = vunpack.c.l.b16 %v43
    %v181 = vunpack.c.l.b16 %v44
    %v182 = vunpack.c.l.b16 %v45
    %v183 = vunpack.c.l.b16 %v46
    %v184 = vunpack.c.l.b16 %v47
    %v185 = vunpack.c.l.b16 %v48
    %v186 = vunpack.c.l.b16 %v49
    %v187 = vunpack.c.l.b16 %v50
    %v188 = vunpack.c.l.b16 %v51
    %v189 = vunpack.c.l.b16 %v52
    %v190 = vunpack.c.l.b16 %v53
    %v191 = vunpack.c.l.b16 %v54
    %v192 = vunpack.c.l.b16 %v55
    %v193 = vunpack.c.l.b16 %v56
    %v194 = vunpack.c.l.b16 %v57
    %v195 = vunpack.c.l.b16 %v58
    %v196 = vpack.c.b16 %v165, %v164
    %v197 = vpack.c.b16 %v167, %v166
    %v198 = vpack.c.b16 %v169, %v168
    %v199 = vpack.c.b16 %v171, %v170
    %v200 = vpack.c.b16 %v173, %v172
    %v201 = vpack.c.b16 %v175, %v174
    %v202 = vpack.c.b16 %v177, %v176
    %v203 = vpack.c.b16 %v179, %v178
    %v204 = vpack.c.b16 %v181, %v180
    %v205 = vpack.c.b16 %v183, %v182
    %v206 = vpack.c.b16 %v185, %v184
    %v207 = vpack.c.b16 %v187, %v186
    %v208 = vpack.c.b16 %v189, %v188
    %v209 = vpack.c.b16 %v191, %v190
    %v210 = vpack.c.b16 %v193, %v192
    %v211 = vpack.c.b16 %v195, %v194
    %228 = vmatpush.bf16.msra.mxu0 %v203
    %229 = vmatpush.bf16.msra.mxu0 %v202
    %230 = vmatpush.bf16.msra.mxu0 %v201
    %231 = vmatpush.bf16.msra.mxu0 %v200
    %232 = vmatpush.bf16.msra.mxu0 %v199
    %233 = vmatpush.bf16.msra.mxu0 %v198
    %234 = vmatpush.bf16.msra.mxu0 %v197
    %235 = vmatpush.bf16.msra.mxu0 %v196
    %236 = vmatmul.bf16.gmra.mxu0 %v120
    %v237 = vpop.f32.mrf.mxu0
    %v238 = vadd.f32 %v125, %v237
    %v239 = vpop.f32.mrf.mxu0
    %v240 = vadd.f32 %v130, %v239
    %241 = vdwg.mxu0
    %242 = vmatpush.bf16.msra.mxu0 %v211
    %243 = vmatpush.bf16.msra.mxu0 %v210
    %244 = vmatpush.bf16.msra.mxu0 %v209
    %245 = vmatpush.bf16.msra.mxu0 %v208
    %246 = vmatpush.bf16.msra.mxu0 %v207
    %247 = vmatpush.bf16.msra.mxu0 %v206
    %248 = vmatpush.bf16.msra.mxu0 %v205
    %249 = vmatpush.bf16.msra.mxu0 %v204
    %250 = vmatmul.bf16.gmra.mxu0 %v121
    %v251 = vpop.f32.mrf.mxu0
    %v252 = vadd.f32 %v238, %v251
    %v253 = vpop.f32.mrf.mxu0
    %v254 = vadd.f32 %v240, %v253
    %255 = vdwg.mxu0
    %v256 = vmax.f32 %v252, 0.0
    %v257 = vmax.f32 %v254, 0.0
    %v258 = vmul.f32 %v256, %v68
    %v259 = vmul.f32 %v257, %v69
    %v260 = vpack.c.bf16 %v259, %v258
    %v268 = vunpack.c.l.b16 %v59
    %v269 = vunpack.c.h.b16 %v59
    %v270 = vunpack.c.l.b16 %v60
    %v271 = vunpack.c.h.b16 %v60
    %v272 = vunpack.c.l.b16 %v61
    %v273 = vunpack.c.h.b16 %v61
    %v274 = vunpack.c.l.b16 %v62
    %v275 = vunpack.c.h.b16 %v62
    %v276 = vunpack.c.l.b16 %v63
    %v277 = vunpack.c.h.b16 %v63
    %v278 = vunpack.c.l.b16 %v64
    %v279 = vunpack.c.h.b16 %v64
    %v280 = vunpack.c.l.b16 %v65
    %v281 = vunpack.c.h.b16 %v65
    %v282 = vpack.c.b16 %v270, %v268
    %v283 = vpack.c.b16 %v271, %v269
    %v284 = vpack.c.b16 %v274, %v272
    %v285 = vpack.c.b16 %v275, %v273
    %v286 = vpack.c.b16 %v278, %v276
    %v287 = vpack.c.b16 %v279, %v277
    %v288 = vpack.c.b16 %v280, %v280
    %v289 = vpack.c.b16 %v281, %v281
    %vm296 = vcmask 408576
    %v298 = vsel %vm296, %v260, 0
    %vm300 = vcmask 1040384
    %v302 = vsel %vm300, %v288, 0
    %v305 = vsel %vm300, %v289, 0
    %307 = vmatpush.bf16.msra.mxu0 0
    %308 = vmatpush.bf16.msra.mxu0 0
    %309 = vmatpush.bf16.msra.mxu0 0
    %310 = vmatpush.bf16.msra.mxu0 0
    %311 = vmatpush.bf16.msra.mxu0 %v302
    %312 = vmatpush.bf16.msra.mxu0 %v286
    %313 = vmatpush.bf16.msra.mxu0 %v284
    %314 = vmatpush.bf16.msra.mxu0 %v282
    %315 = vmatmul.bf16.gmra.mxu0 %v298
    %v316 = vpop.f32.mrf.mxu0
    %v317 = vadd.f32 0.0, %v316
    %v318 = vpop.f32.mrf.mxu0
    %v319 = vadd.f32 0.0, %v318
    %320 = vdwg.mxu0
    %321 = vmatpush.bf16.msra.mxu0 0
    %322 = vmatpush.bf16.msra.mxu0 0
    %323 = vmatpush.bf16.msra.mxu0 0
    %324 = vmatpush.bf16.msra.mxu0 0
    %325 = vmatpush.bf16.msra.mxu0 %v305
    %326 = vmatpush.bf16.msra.mxu0 %v287
    %327 = vmatpush.bf16.msra.mxu0 %v285
    %328 = vmatpush.bf16.msra.mxu0 %v283
    %329 = vmatmul.bf16.gmra.mxu0 %v298
    %v330 = vpop.f32.mrf.mxu0
    %v331 = vadd.f32 0.0, %v330
    %v332 = vpop.f32.mrf.mxu0
    %v333 = vadd.f32 0.0, %v332
    %334 = vdwg.mxu0
    %335 = vst [vmem:[#allocation2 + $0x10] sm:$0xff] %v317
    %336 = vst [vmem:[#allocation2 + $0x18] sm:$0xff] %v331
    %337 = vst [vmem:[#allocation2 + $0x20] sm:$0xff] %v319
    %338 = vst [vmem:[#allocation2 + $0x28] sm:$0xff] %v333
    %s339 = scalar_lea.vmem %s0, 16
    %v340 = vld [vmem:[%s339] sm:$0xff]
    %v341 = vld [vmem:[%s339 + $0x8] sm:$0xff]
    %s342 = scalar_lea.vmem [#allocation2], 48
    %343 = vst [vmem:[%s342] sm:$0xff] %v340
    %344 = vst [vmem:[%s342 + $0x8] sm:$0xff] %v341
    %v345 = vpack.c.bf16 %v340, %v340
    %v346 = vpack.c.bf16 %v341, %v341
    %v348 = vsel %vm85, %v345, 0
    %v351 = vsel %vm85, %v346, 0
    %353 = vmatpush.bf16.msra.mxu0 0
    %354 = vmatpush.bf16.msra.mxu0 0
    %355 = vmatpush.bf16.msra.mxu0 0
    %356 = vmatpush.bf16.msra.mxu0 0
    %357 = vmatpush.bf16.msra.mxu0 0
    %358 = vmatpush.bf16.msra.mxu0 0
    %359 = vmatpush.bf16.msra.mxu0 0
    %360 = vmatpush.bf16.msra.mxu0 %v348
    %361 = vmatmul.bf16.gmra.mxu0 %v83
    %v362 = vpop.f32.mrf.mxu0
    %v363 = vadd.f32 0.0, %v362
    %v364 = vpop.f32.mrf.mxu0
    %v365 = vadd.f32 0.0, %v364
    %366 = vdwg.mxu0
    %367 = vmatpush.bf16.msra.mxu0 0
    %368 = vmatpush.bf16.msra.mxu0 0
    %369 = vmatpush.bf16.msra.mxu0 0
    %370 = vmatpush.bf16.msra.mxu0 0
    %371 = vmatpush.bf16.msra.mxu0 0
    %372 = vmatpush.bf16.msra.mxu0 0
    %373 = vmatpush.bf16.msra.mxu0 0
    %374 = vmatpush.bf16.msra.mxu0 %v351
    %375 = vmatmul.bf16.gmra.mxu0 %v83
    %v376 = vpop.f32.mrf.mxu0
    %v377 = vadd.f32 0.0, %v376
    %v378 = vpop.f32.mrf.mxu0
    %v379 = vadd.f32 0.0, %v378
    %380 = vdwg.mxu0
    %v381 = vpack.c.bf16 %v365, %v363
    %v382 = vpack.c.bf16 %v379, %v377
    %383 = vmatpush.bf16.msra.mxu0 %v203
    %384 = vmatpush.bf16.msra.mxu0 %v202
    %385 = vmatpush.bf16.msra.mxu0 %v201
    %386 = vmatpush.bf16.msra.mxu0 %v200
    %387 = vmatpush.bf16.msra.mxu0 %v199
    %388 = vmatpush.bf16.msra.mxu0 %v198
    %389 = vmatpush.bf16.msra.mxu0 %v197
    %390 = vmatpush.bf16.msra.mxu0 %v196
    %391 = vmatmul.bf16.gmra.mxu0 %v381
    %v392 = vpop.f32.mrf.mxu0
    %v393 = vadd.f32 %v125, %v392
    %v394 = vpop.f32.mrf.mxu0
    %v395 = vadd.f32 %v130, %v394
    %396 = vdwg.mxu0
    %397 = vmatpush.bf16.msra.mxu0 %v211
    %398 = vmatpush.bf16.msra.mxu0 %v210
    %399 = vmatpush.bf16.msra.mxu0 %v209
    %400 = vmatpush.bf16.msra.mxu0 %v208
    %401 = vmatpush.bf16.msra.mxu0 %v207
    %402 = vmatpush.bf16.msra.mxu0 %v206
    %403 = vmatpush.bf16.msra.mxu0 %v205
    %404 = vmatpush.bf16.msra.mxu0 %v204
    %405 = vmatmul.bf16.gmra.mxu0 %v382
    %v406 = vpop.f32.mrf.mxu0
    %v407 = vadd.f32 %v393, %v406
    %v408 = vpop.f32.mrf.mxu0
    %v409 = vadd.f32 %v395, %v408
    %410 = vdwg.mxu0
    %v411 = vmax.f32 %v407, 0.0
    %v412 = vmax.f32 %v409, 0.0
    %v413 = vmul.f32 %v411, %v68
    %v414 = vmul.f32 %v412, %v69
    %v415 = vpack.c.bf16 %v414, %v413
    %v417 = vsel %vm296, %v415, 0
    %419 = vmatpush.bf16.msra.mxu0 0
    %420 = vmatpush.bf16.msra.mxu0 0
    %421 = vmatpush.bf16.msra.mxu0 0
    %422 = vmatpush.bf16.msra.mxu0 0
    %423 = vmatpush.bf16.msra.mxu0 %v302
    %424 = vmatpush.bf16.msra.mxu0 %v286
    %425 = vmatpush.bf16.msra.mxu0 %v284
    %426 = vmatpush.bf16.msra.mxu0 %v282
    %427 = vmatmul.bf16.gmra.mxu0 %v417
    %v428 = vpop.f32.mrf.mxu0
    %v429 = vadd.f32 0.0, %v428
    %v430 = vpop.f32.mrf.mxu0
    %v431 = vadd.f32 0.0, %v430
    %432 = vdwg.mxu0
    %433 = vmatpush.bf16.msra.mxu0 0
    %434 = vmatpush.bf16.msra.mxu0 0
    %435 = vmatpush.bf16.msra.mxu0 0
    %436 = vmatpush.bf16.msra.mxu0 0
    %437 = vmatpush.bf16.msra.mxu0 %v305
    %438 = vmatpush.bf16.msra.mxu0 %v287
    %439 = vmatpush.bf16.msra.mxu0 %v285
    %440 = vmatpush.bf16.msra.mxu0 %v283
    %441 = vmatmul.bf16.gmra.mxu0 %v417
    %v442 = vpop.f32.mrf.mxu0
    %v443 = vadd.f32 0.0, %v442
    %v444 = vpop.f32.mrf.mxu0
    %v445 = vadd.f32 0.0, %v444
    %446 = vdwg.mxu0
    %447 = vst [vmem:[%s342 + $0x10] sm:$0xff] %v429
    %448 = vst [vmem:[%s342 + $0x18] sm:$0xff] %v443
    %449 = vst [vmem:[%s342 + $0x20] sm:$0xff] %v431
    %450 = vst [vmem:[%s342 + $0x28] sm:$0xff] %v445
    // Predicated region
    $region26: #{tpu_custom_call.1} parent=1 // pred_check
      _
    $region27: #{tpu_custom_call.1} parent=1 // pred_check_branch
      %452 = sbr.rel (0) target = $region29
    $region28: #{tpu_custom_call.1} parent=1 // pred_region
      %454 = vsyncadd [#allocation3], 0
      %s455 = sshll.u32 [#allocation2], 4
      %s456 = int_to_ptr.vmem [resolvable:$true] %s455
      %s457 = sshll.u32 %s6, 4
      %s458 = int_to_ptr.hbm [resolvable:$true] %s457
      %463 = dma.vmem_to_hbm [thread:$0]  %s456, 1536, %s458, [#allocation3], 256, 256, 16
    $region29: #{tpu_custom_call.1} parent=1 // pred_fallthru
      _
    // Predicated region
    $region30: #{tpu_custom_call.1} parent=1 // pred_check
      _
    $region31: #{tpu_custom_call.1} parent=1 // pred_check_branch
      %465 = sbr.rel (0) target = $region33
    $region32: #{tpu_custom_call.1} parent=1 // pred_region
      %467 = dma.done [#allocation3], 1536
    $region33: #{tpu_custom_call.1} parent=1 // pred_fallthru
      _
    %468 = vsyncpa [#allocation3], 1

</llo_original>
